<compile_context>
chip_gen: v5e
topology: v5e:2x2
jax: 0.10.0
libtpu: 0.0.40
codegen_flags: <defaults>
</compile_context>

<pallas_src>
import functools

import jax
import jax.numpy as jnp
from jax.experimental import pallas as pl
from jax.experimental.pallas import tpu as pltpu


def _kee_kernel(ent_ref, words_ref, wcat_ref, shift_ref, wfc_ref, out_ref, *, wn, ks):
    """One grid step: BT batch elements (rows = BT*M mentions) at once."""
    rows = ent_ref.shape[0]
    c = shift_ref.shape[-1]
    t = wn - ks + 1

    # In-kernel bf16 cast of the streamed f32 activations (saves a full HBM pass
    # vs casting in the wrapper).
    words_b = words_ref[...].astype(jnp.bfloat16)                       # (rows*WN, W)

    # All KS conv taps in ONE MXU matmul: (rows*WN, W) @ (W, KS*C) -> f32.
    y = jnp.dot(words_b, wcat_ref[...], preferred_element_type=jnp.float32)
    y3 = y.reshape(rows, wn, ks * c)                                    # (rows, WN, KS*C)

    # Tap shift-and-add: lane-aligned channel slices + XLU sublane rotations
    # (valid positions t < T are unaffected by the wraparound; rest is masked).
    acc = y3[:, :, 0:c]
    for k in range(1, ks):
        acc = acc + pltpu.roll(y3[:, :, k * c:(k + 1) * c], shift=wn - k, axis=1)

    # MaxPool over the T valid positions via a masked max over all WN positions.
    pos = jax.lax.broadcasted_iota(jnp.int32, (1, wn, c), 1)
    acc = jnp.where(pos < t, acc, -jnp.inf)
    pooled = jnp.max(acc, axis=1)                                       # (rows, C)

    # BN scale is folded into wcat, so shift + ReLU commute with the max and
    # only touch the pooled (rows, C) block.
    pooled = jnp.maximum(pooled + shift_ref[...], 0.0)

    # concat([entities, pooled]) @ Wfc as one fused (rows, E+C) @ (E+C, V) matmul.
    cat = jnp.concatenate(
        [ent_ref[...].astype(jnp.bfloat16), pooled.astype(jnp.bfloat16)], axis=-1)
    out_ref[...] = jnp.dot(cat, wfc_ref[...],
                           preferred_element_type=jnp.float32).astype(out_ref.dtype)


def _pick_batch_tile(b, m, target_rows=512):
    """Pick the batch tile BT (divisor of B).

    Hard requirement: the (BT*M)-row block must be sublane-aligned (BT*M % 8 == 0)
    or full (BT == B).  Preference order: (1) >=2 grid steps AND rows <= target
    (largest such), (2) >=2 grid steps (smallest such, keeps VMEM bounded),
    (3) rows <= target (largest), (4) full batch.  target_rows=512 keeps the f32
    input blocks plus the (rows*WN, KS*C) f32 conv result comfortably inside
    v7x's 64 MiB VMEM while giving >=85%-roofline sized tiles.
    """
    divisors = [bt for bt in range(1, b + 1) if b % bt == 0]
    aligned = [bt for bt in divisors if (bt * m) % 8 == 0 or bt == b]
    multi = [bt for bt in aligned if b // bt >= 2]
    small_multi = [bt for bt in multi if bt * m <= target_rows]
    if small_multi:
        return max(small_multi)
    if multi:
        return min(multi)
    fits = [bt for bt in aligned if bt * m <= target_rows]
    if fits:
        return max(fits)
    return b


def knowledge_enriched_embedding(entities, words, params, *, batch_tile=None):
    """entities: (B, M, E) f32; words: (B, M, WN, W) f32 -> (B, M, V) f32."""
    wconv, shift, wfc = params          # wconv: (KS, W, C) f32 with BN scale folded in
    B, M, E = entities.shape
    _, _, WN, W = words.shape
    KS, _, C = wconv.shape
    V = wfc.shape[1]

    BT = _pick_batch_tile(B, M) if batch_tile is None else batch_tile
    assert B % BT == 0
    rows = BT * M

    # Glue reshapes only (metadata, no HBM pass); activations stay f32 — the bf16
    # cast happens inside the kernel.  Weights (tiny, one-time) are prepared here.
    ent2d = entities.reshape(B * M, E)
    words2d = words.reshape(B * M * WN, W)
    wcat = jnp.transpose(wconv, (1, 0, 2)).reshape(W, KS * C).astype(jnp.bfloat16)
    wfc_b = wfc.astype(jnp.bfloat16)

    kernel = functools.partial(_kee_kernel, wn=WN, ks=KS)
    out2d = pl.pallas_call(
        kernel,
        out_shape=jax.ShapeDtypeStruct((B * M, V), jnp.float32),
        grid_spec=pltpu.PrefetchScalarGridSpec(
            num_scalar_prefetch=0,
            grid=(B // BT,),
            in_specs=[
                pl.BlockSpec((rows, E), lambda i: (i, 0)),        # entities (f32)
                pl.BlockSpec((rows * WN, W), lambda i: (i, 0)),   # words (f32)
                pl.BlockSpec((W, KS * C), lambda i: (0, 0)),      # fused conv weight (bf16)
                pl.BlockSpec((1, C), lambda i: (0, 0)),           # folded BN/bias shift (f32)
                pl.BlockSpec((E + C, V), lambda i: (0, 0)),       # fused fc weight (bf16)
            ],
            out_specs=pl.BlockSpec((rows, V), lambda i: (i, 0)),
        ),
        compiler_params=pltpu.CompilerParams(
            dimension_semantics=("parallel",),
            vmem_limit_bytes=48 * 1024 * 1024),
    )(ent2d, words2d, wcat, shift, wfc_b)
    return out2d.reshape(B, M, V)


def init_params(key, e_size, w_size, c_out, v_size, ks, eps=1e-6):
    """Deterministic synthetic parameters matching the nn.Module shapes, with
    inference-mode BatchNorm + conv bias folded into (weight-scale, shift)."""
    k1, k2, k3, k4, k5, k6, k7 = jax.random.split(key, 7)
    conv_w = 0.05 * jax.random.normal(k1, (c_out, 1, ks, w_size), jnp.float32)  # Conv2d weight
    conv_b = 0.05 * jax.random.normal(k2, (c_out,), jnp.float32)                # Conv2d bias
    gamma = 1.0 + 0.1 * jax.random.normal(k3, (c_out,), jnp.float32)            # BN weight
    beta = 0.1 * jax.random.normal(k4, (c_out,), jnp.float32)                   # BN bias
    run_mean = 0.1 * jax.random.normal(k5, (c_out,), jnp.float32)               # BN running_mean
    run_var = 1.0 + 0.1 * jax.random.uniform(k6, (c_out,), jnp.float32)         # BN running_var
    fc_w = 0.05 * jax.random.normal(k7, (v_size, e_size + c_out), jnp.float32)  # Linear (bias=False)

    # Fold inference-mode BN (eps=1e-6 as in the module) and conv bias:
    #   bn(conv(x)) = scale * conv_nobias(x) + shift
    # with scale folded directly into the conv weight (so only shift remains in-kernel).
    scale = gamma / jnp.sqrt(run_var + eps)                       # (C,)
    shift = (conv_b - run_mean) * scale + beta                    # (C,)

    # Conv weight (C, 1, KS, W) -> (KS, W, C) matmul form, BN scale folded in;
    # Linear weight (V, E+C) -> (E+C, V).
    wconv = jnp.transpose(conv_w[:, 0, :, :], (1, 2, 0)) * scale  # (KS, W, C)
    wfc = fc_w.T
    return (wconv, shift.reshape(1, -1), wfc)


def reference_forward(entities, words, params):
    """Pure-JAX reference of the same (bf16-matmul, f32-accumulate) math."""
    wconv, shift, wfc = params
    B, M, E = entities.shape
    _, _, WN, W = words.shape
    KS, _, C = wconv.shape
    T = WN - KS + 1
    wb = words.astype(jnp.bfloat16)
    wc = wconv.astype(jnp.bfloat16)
    acc = jnp.zeros((B, M, T, C), jnp.float32)
    for k in range(KS):
        acc = acc + jnp.einsum('bmtw,wc->bmtc', wb[:, :, k:k + T, :], wc[k],
                               preferred_element_type=jnp.float32)
    pooled = jnp.maximum(jnp.max(acc, axis=2) + shift[0], 0.0)    # (B, M, C)
    cat = jnp.concatenate([entities, pooled], axis=-1).astype(jnp.bfloat16)
    return jnp.einsum('bmk,kv->bmv', cat, wfc.astype(jnp.bfloat16),
                      preferred_element_type=jnp.float32)


if __name__ == "__main__":
    # Small shapes consistent with the module: e_size = w_size = C = V = 128,
    # word_num = 8, conv_kernel_size = 3, batch = 2, mentions-per-batch M = 4.
    B, M = 2, 4
    E = W = C = V = 128
    WN, KS = 8, 3

    key = jax.random.PRNGKey(0)
    k_ent, k_words, k_par = jax.random.split(key, 3)
    entities = jax.random.normal(k_ent, (B, M, E), jnp.float32)
    words = jax.random.normal(k_words, (B, M, WN, W), jnp.float32)
    params = init_params(k_par, E, W, C, V, KS)

    out = knowledge_enriched_embedding(entities, words, params)
    out = jax.block_until_ready(out)

    ref = reference_forward(entities, words, params)
    assert out.shape == (B, M, V), out.shape
    assert jnp.allclose(out, ref, atol=2e-2, rtol=2e-2), "kernel mismatch vs reference"
    print("KERNEL_OK")
</pallas_src>

<mosaic_0001>
module attributes {stable_mosaic.version = 11 : i64} {
  func.func @_kee_kernel(%arg0: i32, %arg1: memref<8x128xf32, #tpu.memory_space<vmem>>, %arg2: memref<64x128xf32, #tpu.memory_space<vmem>>, %arg3: memref<128x384xbf16, #tpu.memory_space<vmem>>, %arg4: memref<1x128xf32, #tpu.memory_space<vmem>>, %arg5: memref<256x128xbf16, #tpu.memory_space<vmem>>, %arg6: memref<8x128xf32, #tpu.memory_space<vmem>>) attributes {dimension_semantics = [#tpu.dimension_semantics<parallel>], iteration_bounds = array<i64: 1>, scalar_prefetch = 0 : i64, scratch_operands = 0 : i64, tpu.core_type = #tpu.core_type<tc>, window_params = [{transform_indices = @transform_0, window_bounds = array<i64: 8, 128>}, {transform_indices = @transform_1, window_bounds = array<i64: 64, 128>}, {pipeline_mode = #tpu.pipeline_mode<synchronous>, transform_indices = @transform_2, window_bounds = array<i64: 128, 384>}, {pipeline_mode = #tpu.pipeline_mode<synchronous>, transform_indices = @transform_3, window_bounds = array<i64: 1, 128>}, {pipeline_mode = #tpu.pipeline_mode<synchronous>, transform_indices = @transform_4, window_bounds = array<i64: 256, 128>}, {transform_indices = @transform_5, window_bounds = array<i64: 8, 128>}]} {
    %c0 = arith.constant 0 : index
    %c0_0 = arith.constant 0 : index
    %0 = vector.load %arg2[%c0, %c0_0] : memref<64x128xf32, #tpu.memory_space<vmem>>, vector<64x128xf32>
    %1 = arith.truncf %0 : vector<64x128xf32> to vector<64x128xbf16>
    %c0_1 = arith.constant 0 : index
    %c0_2 = arith.constant 0 : index
    %2 = vector.load %arg3[%c0_1, %c0_2] : memref<128x384xbf16, #tpu.memory_space<vmem>>, vector<128x384xbf16>
    %cst = arith.constant dense<0.000000e+00> : vector<64x384xf32>
    %3 = tpu.matmul %1, %2, %cst {dimension_numbers = #tpu.dot_dimension_numbers<[1], [0], [0], [1], [0, 0, 1, 1], [], []>} : vector<64x128xbf16>, vector<128x384xbf16>, vector<64x384xf32> -> vector<64x384xf32>
    %4 = vector.shape_cast %3 : vector<64x384xf32> to vector<8x8x384xf32>
    %5 = vector.extract_strided_slice %4 {offsets = [0, 0, 0], sizes = [8, 8, 128], strides = [1, 1, 1]} : vector<8x8x384xf32> to vector<8x8x128xf32>
    %6 = vector.extract_strided_slice %4 {offsets = [0, 0, 128], sizes = [8, 8, 128], strides = [1, 1, 1]} : vector<8x8x384xf32> to vector<8x8x128xf32>
    %c7_i32 = arith.constant 7 : i32
    %7 = tpu.dynamic_rotate %6 by %c7_i32 dim 1 : vector<8x8x128xf32>, i32 -> vector<8x8x128xf32>
    %8 = arith.addf %5, %7 : vector<8x8x128xf32>
    %9 = vector.extract_strided_slice %4 {offsets = [0, 0, 256], sizes = [8, 8, 128], strides = [1, 1, 1]} : vector<8x8x384xf32> to vector<8x8x128xf32>
    %c6_i32 = arith.constant 6 : i32
    %10 = tpu.dynamic_rotate %9 by %c6_i32 dim 1 : vector<8x8x128xf32>, i32 -> vector<8x8x128xf32>
    %11 = arith.addf %8, %10 : vector<8x8x128xf32>
    %12 = tpu.iota {dimensions = array<i32: 1>} : vector<1x8x128xi32>
    %c6_i32_3 = arith.constant 6 : i32
    %13 = vector.broadcast %c6_i32_3 : i32 to vector<1x8x128xi32>
    %14 = arith.cmpi slt, %12, %13 : vector<1x8x128xi32>
    %cst_4 = arith.constant 0xFF800000 : f32
    %15 = vector.shape_cast %14 : vector<1x8x128xi1> to vector<1x8x128xi1>
    %16 = vector.broadcast %15 : vector<1x8x128xi1> to vector<8x8x128xi1>
    %17 = vector.broadcast %cst_4 : f32 to vector<8x8x128xf32>
    %18 = arith.select %16, %11, %17 : vector<8x8x128xi1>, vector<8x8x128xf32>
    %cst_5 = arith.constant dense<0xFF800000> : vector<8x128xf32>
    %19 = vector.multi_reduction <maximumf>, %18, %cst_5 [1] : vector<8x8x128xf32> to vector<8x128xf32>
    %c0_6 = arith.constant 0 : index
    %c0_7 = arith.constant 0 : index
    %20 = vector.load %arg4[%c0_6, %c0_7] : memref<1x128xf32, #tpu.memory_space<vmem>>, vector<1x128xf32>
    %21 = vector.broadcast %20 : vector<1x128xf32> to vector<8x128xf32>
    %22 = arith.addf %19, %21 : vector<8x128xf32>
    %cst_8 = arith.constant 0.000000e+00 : f32
    %23 = vector.broadcast %cst_8 : f32 to vector<8x128xf32>
    %24 = arith.maximumf %22, %23 : vector<8x128xf32>
    %c0_9 = arith.constant 0 : index
    %c0_10 = arith.constant 0 : index
    %25 = vector.load %arg1[%c0_9, %c0_10] : memref<8x128xf32, #tpu.memory_space<vmem>>, vector<8x128xf32>
    %26 = arith.truncf %25 : vector<8x128xf32> to vector<8x128xbf16>
    %27 = arith.truncf %24 : vector<8x128xf32> to vector<8x128xbf16>
    %28 = tpu.concatenate %26, %27 in 1 : vector<8x128xbf16>, vector<8x128xbf16> -> vector<8x256xbf16>
    %c0_11 = arith.constant 0 : index
    %c0_12 = arith.constant 0 : index
    %29 = vector.load %arg5[%c0_11, %c0_12] : memref<256x128xbf16, #tpu.memory_space<vmem>>, vector<256x128xbf16>
    %cst_13 = arith.constant dense<0.000000e+00> : vector<8x128xf32>
    %30 = tpu.matmul %28, %29, %cst_13 {dimension_numbers = #tpu.dot_dimension_numbers<[1], [0], [0], [1], [0, 0, 1, 1], [], []>} : vector<8x256xbf16>, vector<256x128xbf16>, vector<8x128xf32> -> vector<8x128xf32>
    %c0_14 = arith.constant 0 : index
    %c0_15 = arith.constant 0 : index
    %31 = vector.load %arg6[%c0_14, %c0_15] : memref<8x128xf32, #tpu.memory_space<vmem>>, vector<8x128xf32>
    tpu.vector_store %arg6[%c0_14, %c0_15], %30 {strides = array<i32>} : memref<8x128xf32, #tpu.memory_space<vmem>>, vector<8x128xf32>,
    return
  }
  func.func @transform_0(%arg0: i32) -> (i32, i32) {
    %c0_i32 = arith.constant 0 : i32
    %c0_i32_0 = arith.constant 0 : i32
    return %arg0, %c0_i32 : i32, i32
  }
  func.func @transform_1(%arg0: i32) -> (i32, i32) {
    %c0_i32 = arith.constant 0 : i32
    %c0_i32_0 = arith.constant 0 : i32
    return %arg0, %c0_i32 : i32, i32
  }
  func.func @transform_2(%arg0: i32) -> (i32, i32) {
    %c0_i32 = arith.constant 0 : i32
    %c0_i32_0 = arith.constant 0 : i32
    %c0_i32_1 = arith.constant 0 : i32
    return %c0_i32, %c0_i32_0 : i32, i32
  }
  func.func @transform_3(%arg0: i32) -> (i32, i32) {
    %c0_i32 = arith.constant 0 : i32
    %c0_i32_0 = arith.constant 0 : i32
    %c0_i32_1 = arith.constant 0 : i32
    return %c0_i32, %c0_i32_0 : i32, i32
  }
  func.func @transform_4(%arg0: i32) -> (i32, i32) {
    %c0_i32 = arith.constant 0 : i32
    %c0_i32_0 = arith.constant 0 : i32
    %c0_i32_1 = arith.constant 0 : i32
    return %c0_i32, %c0_i32_0 : i32, i32
  }
  func.func @transform_5(%arg0: i32) -> (i32, i32) {
    %c0_i32 = arith.constant 0 : i32
    %c0_i32_0 = arith.constant 0 : i32
    return %arg0, %c0_i32 : i32, i32
  }
}

</mosaic_0001>

<llo_original>
// kernel: tpu_custom_call.1
$region0: #{tpu_custom_call.1}
  #allocation0 [shape = 'u32[]', space=smem, size = 0x4, offset = 0x4, fixed_abs, tag = 'smem constant byte address 0x4 - core index']
  #allocation1 [shape = 'u32[72,128]{1,0:T(1,128)}', space=vmem, size = 0x9000, scoped, tag = 'internal scratch']
  %s0 = inlined_call_operand.hbm [shape: f32[8,128], index: 0, kind: input, shape index: {}]
  %s1 = inlined_call_operand.hbm [shape: f32[64,128], index: 1, kind: input, shape index: {}]
  %s2 = inlined_call_operand.hbm [shape: bf16[128,384], index: 2, kind: input, shape index: {}]
  %s3 = inlined_call_operand.vmem [shape: f32[1,128], index: 3, kind: input, shape index: {}]
  %s4 = inlined_call_operand.hbm [shape: bf16[256,128], index: 4, kind: input, shape index: {}]
  %s5 = inlined_call_operand.hbm [shape: f32[8,128], index: 5, kind: output, shape index: {}]
  %s6 = sld [smem:[#allocation0]]
  $region46: #{tpu_custom_call.1} parent=0
    _
  %s8 = ssub.s32 1, %s6
  %s9 = scalar_select 0, %s8, %s6
  $region1: #{tpu_custom_call.1} parent=0
    #allocation2 [shape = 'u8[4096]{0}', space=vmem, size = 0x1000, scoped, tag = 'input window, operand 0, single buffered']
    #allocation3 [shape = 's32[1]{0}', space=sflag, size = 0x4, scoped, tag = 'scoped memory for tpu_custom_call.1']
    #allocation4 [shape = 's32[1]{0}', space=sflag, size = 0x4, scoped, tag = 'scoped memory for tpu_custom_call.1']
    #allocation5 [shape = 'u8[32768]{0}', space=vmem, size = 0x8000, scoped, tag = 'input window, operand 1, single buffered']
    #allocation6 [shape = 's32[1]{0}', space=sflag, size = 0x4, scoped, tag = 'scoped memory for tpu_custom_call.1']
    #allocation7 [shape = 'u8[98304]{0}', space=vmem, size = 0x18000, scoped, tag = 'input window, operand 2, single buffered']
    #allocation8 [shape = 'u8[65536]{0}', space=vmem, size = 0x10000, scoped, tag = 'input window, operand 4, single buffered']
    #allocation9 [shape = 's32[1]{0}', space=sflag, size = 0x4, scoped, tag = 'scoped memory for tpu_custom_call.1']
    #allocation10 [shape = 'u8[4096]{0}', space=vmem, size = 0x1000, scoped, tag = 'output window, operand 0, single buffered']
    %10 = vsyncpa [#allocation3], 0
    %11 = vsyncpa [#allocation6], 0
    %12 = vsyncpa [#allocation9], 0
    %13 = vsyncpa [#allocation4], 0
    // Predicated region
    $region2: #{tpu_custom_call.1} parent=1 // pred_check
      _
    $region3: #{tpu_custom_call.1} parent=1 // pred_check_branch
      %15 = sbr.rel (0) target = $region5
    $region4: #{tpu_custom_call.1} parent=1 // pred_region
      %17 = vsyncadd [#allocation3], 0
      %s19 = sshll.u32 %s0, 4
      %s20 = int_to_ptr.hbm [resolvable:$true] %s19
      %s21 = sshll.u32 [#allocation2], 4
      %s22 = int_to_ptr.vmem [resolvable:$true] %s21
      %24 = dma.hbm_to_vmem [thread:$0]  %s20, 128, %s22, [#allocation3]
    $region5: #{tpu_custom_call.1} parent=1 // pred_fallthru
      _
    // Predicated region
    $region6: #{tpu_custom_call.1} parent=1 // pred_check
      _
    $region7: #{tpu_custom_call.1} parent=1 // pred_check_branch
      %26 = sbr.rel (0) target = $region9
    $region8: #{tpu_custom_call.1} parent=1 // pred_region
      %28 = vsyncadd [#allocation6], 0
      %s29 = sshll.u32 %s1, 4
      %s30 = int_to_ptr.hbm [resolvable:$true] %s29
      %s31 = sshll.u32 [#allocation5], 4
      %s32 = int_to_ptr.vmem [resolvable:$true] %s31
      %37 = dma.hbm_to_vmem [thread:$0]  %s30, 1024, %s32, [#allocation6], 128, 128, 8
    $region9: #{tpu_custom_call.1} parent=1 // pred_fallthru
      _
    // Predicated region
    $region10: #{tpu_custom_call.1} parent=1 // pred_check
      _
    $region11: #{tpu_custom_call.1} parent=1 // pred_check_branch
      %39 = sbr.rel (0) target = $region13
    $region12: #{tpu_custom_call.1} parent=1 // pred_region
      %41 = vsyncadd [#allocation6], 0
      %s42 = sshll.u32 %s2, 4
      %s43 = int_to_ptr.hbm [resolvable:$true] %s42
      %s44 = sshll.u32 [#allocation7], 4
      %s45 = int_to_ptr.vmem [resolvable:$true] %s44
      %50 = dma.hbm_to_vmem [thread:$0]  %s43, 3072, %s45, [#allocation6], 192, 192, 12
    $region13: #{tpu_custom_call.1} parent=1 // pred_fallthru
      _
    // Predicated region
    $region14: #{tpu_custom_call.1} parent=1 // pred_check
      _
    $region15: #{tpu_custom_call.1} parent=1 // pred_check_branch
      %52 = sbr.rel (0) target = $region17
    $region16: #{tpu_custom_call.1} parent=1 // pred_region
      _
    $region17: #{tpu_custom_call.1} parent=1 // pred_fallthru
      _
    // Predicated region
    $region18: #{tpu_custom_call.1} parent=1 // pred_check
      _
    $region19: #{tpu_custom_call.1} parent=1 // pred_check_branch
      %54 = sbr.rel (0) target = $region21
    $region20: #{tpu_custom_call.1} parent=1 // pred_region
      %56 = vsyncadd [#allocation9], 0
      %s57 = sshll.u32 %s4, 4
      %s58 = int_to_ptr.hbm [resolvable:$true] %s57
      %s59 = sshll.u32 [#allocation8], 4
      %s60 = int_to_ptr.vmem [resolvable:$true] %s59
      %65 = dma.hbm_to_vmem [thread:$0]  %s58, 2048, %s60, [#allocation9], 64, 64, 4
    $region21: #{tpu_custom_call.1} parent=1 // pred_fallthru
      _
    // Predicated region
    $region22: #{tpu_custom_call.1} parent=1 // pred_check
      _
    $region23: #{tpu_custom_call.1} parent=1 // pred_check_branch
      %67 = sbr.rel (0) target = $region25
    $region24: #{tpu_custom_call.1} parent=1 // pred_region
      %69 = dma.done [#allocation3], 128
    $region25: #{tpu_custom_call.1} parent=1 // pred_fallthru
      _
    // Predicated region
    $region26: #{tpu_custom_call.1} parent=1 // pred_check
      _
    $region27: #{tpu_custom_call.1} parent=1 // pred_check_branch
      %71 = sbr.rel (0) target = $region29
    $region28: #{tpu_custom_call.1} parent=1 // pred_region
      %73 = dma.done [#allocation6], 1024
    $region29: #{tpu_custom_call.1} parent=1 // pred_fallthru
      _
    // Predicated region
    $region30: #{tpu_custom_call.1} parent=1 // pred_check
      _
    $region31: #{tpu_custom_call.1} parent=1 // pred_check_branch
      %75 = sbr.rel (0) target = $region33
    $region32: #{tpu_custom_call.1} parent=1 // pred_region
      %77 = dma.done [#allocation6], 3072
    $region33: #{tpu_custom_call.1} parent=1 // pred_fallthru
      _
    // Predicated region
    $region34: #{tpu_custom_call.1} parent=1 // pred_check
      _
    $region35: #{tpu_custom_call.1} parent=1 // pred_check_branch
      %79 = sbr.rel (0) target = $region37
    $region36: #{tpu_custom_call.1} parent=1 // pred_region
      %81 = dma.done [#allocation9], 2048
    $region37: #{tpu_custom_call.1} parent=1 // pred_fallthru
      _
    %v82 = vld [vmem:[#allocation5] sm:$0xff]
    %v83 = vld [vmem:[#allocation5 + $0x8] sm:$0xff]
    %v84 = vld [vmem:[#allocation5 + $0x10] sm:$0xff]
    %v85 = vld [vmem:[#allocation5 + $0x18] sm:$0xff]
    %v86 = vld [vmem:[#allocation5 + $0x20] sm:$0xff]
    %v87 = vld [vmem:[#allocation5 + $0x28] sm:$0xff]
    %v88 = vld [vmem:[#allocation5 + $0x30] sm:$0xff]
    %v89 = vld [vmem:[#allocation5 + $0x38] sm:$0xff]
    %v90 = vpack.c.bf16 %v83, %v82
    %v91 = vpack.c.bf16 %v85, %v84
    %v92 = vpack.c.bf16 %v87, %v86
    %v93 = vpack.c.bf16 %v89, %v88
    %v94 = vld [vmem:[#allocation7] sm:$0xff]
    %v95 = vld [vmem:[#allocation7 + $0x8] sm:$0xf]
    %v96 = vld [vmem:[#allocation7 + $0xc] sm:$0xff]
    %v97 = vld [vmem:[#allocation7 + $0x14] sm:$0xf]
    %v98 = vld [vmem:[#allocation7 + $0x18] sm:$0xff]
    %v99 = vld [vmem:[#allocation7 + $0x20] sm:$0xf]
    %v100 = vld [vmem:[#allocation7 + $0x24] sm:$0xff]
    %v101 = vld [vmem:[#allocation7 + $0x2c] sm:$0xf]
    %v102 = vld [vmem:[#allocation7 + $0x30] sm:$0xff]
    %v103 = vld [vmem:[#allocation7 + $0x38] sm:$0xf]
    %v104 = vld [vmem:[#allocation7 + $0x3c] sm:$0xff]
    %v105 = vld [vmem:[#allocation7 + $0x44] sm:$0xf]
    %v106 = vld [vmem:[#allocation7 + $0x48] sm:$0xff]
    %v107 = vld [vmem:[#allocation7 + $0x50] sm:$0xf]
    %v108 = vld [vmem:[#allocation7 + $0x54] sm:$0xff]
    %v109 = vld [vmem:[#allocation7 + $0x5c] sm:$0xf]
    %v110 = vld [vmem:[#allocation7 + $0x60] sm:$0xff]
    %v111 = vld [vmem:[#allocation7 + $0x68] sm:$0xf]
    %v112 = vld [vmem:[#allocation7 + $0x6c] sm:$0xff]
    %v113 = vld [vmem:[#allocation7 + $0x74] sm:$0xf]
    %v114 = vld [vmem:[#allocation7 + $0x78] sm:$0xff]
    %v115 = vld [vmem:[#allocation7 + $0x80] sm:$0xf]
    %v116 = vld [vmem:[#allocation7 + $0x84] sm:$0xff]
    %v117 = vld [vmem:[#allocation7 + $0x8c] sm:$0xf]
    %v118 = vld [vmem:[#allocation7 + $0x90] sm:$0xff]
    %v119 = vld [vmem:[#allocation7 + $0x98] sm:$0xf]
    %v120 = vld [vmem:[#allocation7 + $0x9c] sm:$0xff]
    %v121 = vld [vmem:[#allocation7 + $0xa4] sm:$0xf]
    %v122 = vld [vmem:[#allocation7 + $0xa8] sm:$0xff]
    %v123 = vld [vmem:[#allocation7 + $0xb0] sm:$0xf]
    %v124 = vld [vmem:[#allocation7 + $0xb4] sm:$0xff]
    %v125 = vld [vmem:[#allocation7 + $0xbc] sm:$0xf]
    %v158 = vunpack.c.l.b16 %v94
    %v159 = vunpack.c.h.b16 %v94
    %v160 = vunpack.c.l.b16 %v95
    %v161 = vunpack.c.l.b16 %v96
    %v162 = vunpack.c.h.b16 %v96
    %v163 = vunpack.c.l.b16 %v97
    %v164 = vunpack.c.l.b16 %v98
    %v165 = vunpack.c.h.b16 %v98
    %v166 = vunpack.c.l.b16 %v99
    %v167 = vunpack.c.l.b16 %v100
    %v168 = vunpack.c.h.b16 %v100
    %v169 = vunpack.c.l.b16 %v101
    %v170 = vunpack.c.l.b16 %v102
    %v171 = vunpack.c.h.b16 %v102
    %v172 = vunpack.c.l.b16 %v103
    %v173 = vunpack.c.l.b16 %v104
    %v174 = vunpack.c.h.b16 %v104
    %v175 = vunpack.c.l.b16 %v105
    %v176 = vunpack.c.l.b16 %v106
    %v177 = vunpack.c.h.b16 %v106
    %v178 = vunpack.c.l.b16 %v107
    %v179 = vunpack.c.l.b16 %v108
    %v180 = vunpack.c.h.b16 %v108
    %v181 = vunpack.c.l.b16 %v109
    %v182 = vunpack.c.l.b16 %v110
    %v183 = vunpack.c.h.b16 %v110
    %v184 = vunpack.c.l.b16 %v111
    %v185 = vunpack.c.l.b16 %v112
    %v186 = vunpack.c.h.b16 %v112
    %v187 = vunpack.c.l.b16 %v113
    %v188 = vunpack.c.l.b16 %v114
    %v189 = vunpack.c.h.b16 %v114
    %v190 = vunpack.c.l.b16 %v115
    %v191 = vunpack.c.l.b16 %v116
    %v192 = vunpack.c.h.b16 %v116
    %v193 = vunpack.c.l.b16 %v117
    %v194 = vunpack.c.l.b16 %v118
    %v195 = vunpack.c.h.b16 %v118
    %v196 = vunpack.c.l.b16 %v119
    %v197 = vunpack.c.l.b16 %v120
    %v198 = vunpack.c.h.b16 %v120
    %v199 = vunpack.c.l.b16 %v121
    %v200 = vunpack.c.l.b16 %v122
    %v201 = vunpack.c.h.b16 %v122
    %v202 = vunpack.c.l.b16 %v123
    %v203 = vunpack.c.l.b16 %v124
    %v204 = vunpack.c.h.b16 %v124
    %v205 = vunpack.c.l.b16 %v125
    %v206 = vpack.c.b16 %v161, %v158
    %v207 = vpack.c.b16 %v162, %v159
    %v208 = vpack.c.b16 %v163, %v160
    %v209 = vpack.c.b16 %v167, %v164
    %v210 = vpack.c.b16 %v168, %v165
    %v211 = vpack.c.b16 %v169, %v166
    %v212 = vpack.c.b16 %v173, %v170
    %v213 = vpack.c.b16 %v174, %v171
    %v214 = vpack.c.b16 %v175, %v172
    %v215 = vpack.c.b16 %v179, %v176
    %v216 = vpack.c.b16 %v180, %v177
    %v217 = vpack.c.b16 %v181, %v178
    %v218 = vpack.c.b16 %v185, %v182
    %v219 = vpack.c.b16 %v186, %v183
    %v220 = vpack.c.b16 %v187, %v184
    %v221 = vpack.c.b16 %v191, %v188
    %v222 = vpack.c.b16 %v192, %v189
    %v223 = vpack.c.b16 %v193, %v190
    %v224 = vpack.c.b16 %v197, %v194
    %v225 = vpack.c.b16 %v198, %v195
    %v226 = vpack.c.b16 %v199, %v196
    %v227 = vpack.c.b16 %v203, %v200
    %v228 = vpack.c.b16 %v204, %v201
    %v229 = vpack.c.b16 %v205, %v202
    %254 = vmatpush.bf16.msra.mxu0 %v227
    %255 = vmatpush.bf16.msra.mxu0 %v224
    %256 = vmatpush.bf16.msra.mxu0 %v221
    %257 = vmatpush.bf16.msra.mxu0 %v218
    %258 = vmatpush.bf16.msra.mxu0 %v215
    %259 = vmatpush.bf16.msra.mxu0 %v212
    %260 = vmatpush.bf16.msra.mxu0 %v209
    %261 = vmatpush.bf16.msra.mxu0 %v206
    %262 = vmatmul.bf16.gmra.mxu0 %v90
    %v263 = vpop.f32.mrf.mxu0
    %v264 = vadd.f32 0.0, %v263
    %v265 = vpop.f32.mrf.mxu0
    %v266 = vadd.f32 0.0, %v265
    %267 = vmatmul.bf16.gmra.mxu0 %v91
    %v268 = vpop.f32.mrf.mxu0
    %v269 = vadd.f32 0.0, %v268
    %v270 = vpop.f32.mrf.mxu0
    %v271 = vadd.f32 0.0, %v270
    %272 = vmatmul.bf16.gmra.mxu0 %v92
    %v273 = vpop.f32.mrf.mxu0
    %v274 = vadd.f32 0.0, %v273
    %v275 = vpop.f32.mrf.mxu0
    %v276 = vadd.f32 0.0, %v275
    %277 = vmatmul.bf16.gmra.mxu0 %v93
    %v278 = vpop.f32.mrf.mxu0
    %v279 = vadd.f32 0.0, %v278
    %v280 = vpop.f32.mrf.mxu0
    %v281 = vadd.f32 0.0, %v280
    %282 = vdwg.mxu0
    %283 = vmatpush.bf16.msra.mxu0 %v228
    %284 = vmatpush.bf16.msra.mxu0 %v225
    %285 = vmatpush.bf16.msra.mxu0 %v222
    %286 = vmatpush.bf16.msra.mxu0 %v219
    %287 = vmatpush.bf16.msra.mxu0 %v216
    %288 = vmatpush.bf16.msra.mxu0 %v213
    %289 = vmatpush.bf16.msra.mxu0 %v210
    %290 = vmatpush.bf16.msra.mxu0 %v207
    %291 = vmatmul.bf16.gmra.mxu0 %v90
    %v292 = vpop.f32.mrf.mxu0
    %v293 = vadd.f32 0.0, %v292
    %v294 = vpop.f32.mrf.mxu0
    %v295 = vadd.f32 0.0, %v294
    %296 = vmatmul.bf16.gmra.mxu0 %v91
    %v297 = vpop.f32.mrf.mxu0
    %v298 = vadd.f32 0.0, %v297
    %v299 = vpop.f32.mrf.mxu0
    %v300 = vadd.f32 0.0, %v299
    %301 = vmatmul.bf16.gmra.mxu0 %v92
    %v302 = vpop.f32.mrf.mxu0
    %v303 = vadd.f32 0.0, %v302
    %v304 = vpop.f32.mrf.mxu0
    %v305 = vadd.f32 0.0, %v304
    %306 = vmatmul.bf16.gmra.mxu0 %v93
    %v307 = vpop.f32.mrf.mxu0
    %v308 = vadd.f32 0.0, %v307
    %v309 = vpop.f32.mrf.mxu0
    %v310 = vadd.f32 0.0, %v309
    %311 = vdwg.mxu0
    %312 = vmatpush.bf16.msra.mxu0 %v229
    %313 = vmatpush.bf16.msra.mxu0 %v226
    %314 = vmatpush.bf16.msra.mxu0 %v223
    %315 = vmatpush.bf16.msra.mxu0 %v220
    %316 = vmatpush.bf16.msra.mxu0 %v217
    %317 = vmatpush.bf16.msra.mxu0 %v214
    %318 = vmatpush.bf16.msra.mxu0 %v211
    %319 = vmatpush.bf16.msra.mxu0 %v208
    %320 = vmatmul.bf16.gmra.mxu0 %v90
    %v321 = vpop.f32.mrf.mxu0
    %v322 = vadd.f32 0.0, %v321
    %v323 = vpop.f32.mrf.mxu0
    %v324 = vadd.f32 0.0, %v323
    %325 = vmatmul.bf16.gmra.mxu0 %v91
    %v326 = vpop.f32.mrf.mxu0
    %v327 = vadd.f32 0.0, %v326
    %v328 = vpop.f32.mrf.mxu0
    %v329 = vadd.f32 0.0, %v328
    %330 = vmatmul.bf16.gmra.mxu0 %v92
    %v331 = vpop.f32.mrf.mxu0
    %v332 = vadd.f32 0.0, %v331
    %v333 = vpop.f32.mrf.mxu0
    %v334 = vadd.f32 0.0, %v333
    %335 = vmatmul.bf16.gmra.mxu0 %v93
    %v336 = vpop.f32.mrf.mxu0
    %v337 = vadd.f32 0.0, %v336
    %v338 = vpop.f32.mrf.mxu0
    %v339 = vadd.f32 0.0, %v338
    %340 = vdwg.mxu0
    %v341 = vrot.slane %v293, 1
    %v342 = vrot.slane %v295, 1
    %v343 = vrot.slane %v298, 1
    %v344 = vrot.slane %v300, 1
    %v345 = vrot.slane %v303, 1
    %v346 = vrot.slane %v305, 1
    %v347 = vrot.slane %v308, 1
    %v348 = vrot.slane %v310, 1
    %v349 = vadd.f32 %v264, %v341
    %v350 = vadd.f32 %v266, %v342
    %v351 = vadd.f32 %v269, %v343
    %v352 = vadd.f32 %v271, %v344
    %v353 = vadd.f32 %v274, %v345
    %v354 = vadd.f32 %v276, %v346
    %v355 = vadd.f32 %v279, %v347
    %v356 = vadd.f32 %v281, %v348
    %v357 = vrot.slane %v322, 2
    %v358 = vrot.slane %v324, 2
    %v359 = vrot.slane %v327, 2
    %v360 = vrot.slane %v329, 2
    %v361 = vrot.slane %v332, 2
    %v362 = vrot.slane %v334, 2
    %v363 = vrot.slane %v337, 2
    %v364 = vrot.slane %v339, 2
    %v365 = vadd.f32 %v349, %v357
    %v366 = vadd.f32 %v350, %v358
    %v367 = vadd.f32 %v351, %v359
    %v368 = vadd.f32 %v352, %v360
    %v369 = vadd.f32 %v353, %v361
    %v370 = vadd.f32 %v354, %v362
    %v371 = vadd.f32 %v355, %v363
    %v372 = vadd.f32 %v356, %v364
    %v373 = vlaneseq
    %v374 = vshrl.u32 %v373, 7
    %vm375 = vcmp.lt.s32.totalorder %v374, 6
    %v376 = vsel %vm375, 1, 0
    %vm377 = vcmp.eq.s32.totalorder %v376, 1
    %v378 = vsel %vm377, %v365, -inf
    %v379 = vsel %vm377, %v366, -inf
    %v380 = vsel %vm377, %v367, -inf
    %v381 = vsel %vm377, %v368, -inf
    %v382 = vsel %vm377, %v369, -inf
    %v383 = vsel %vm377, %v370, -inf
    %v384 = vsel %vm377, %v371, -inf
    %v385 = vsel %vm377, %v372, -inf
    %v386 = vrot.slane %v378, 4
    %v387 = vmax.f32 %v378, %v386
    %v388 = vrot.slane %v387, 2
    %v389 = vmax.f32 %v387, %v388
    %v390 = vrot.slane %v389, 1
    %v391 = vmax.f32 %v389, %v390
    %v392 = vrot.slane %v379, 4
    %v393 = vmax.f32 %v379, %v392
    %v394 = vrot.slane %v393, 2
    %v395 = vmax.f32 %v393, %v394
    %v396 = vrot.slane %v395, 1
    %v397 = vmax.f32 %v395, %v396
    %v398 = vrot.slane %v380, 4
    %v399 = vmax.f32 %v380, %v398
    %v400 = vrot.slane %v399, 2
    %v401 = vmax.f32 %v399, %v400
    %v402 = vrot.slane %v401, 1
    %v403 = vmax.f32 %v401, %v402
    %v404 = vrot.slane %v381, 4
    %v405 = vmax.f32 %v381, %v404
    %v406 = vrot.slane %v405, 2
    %v407 = vmax.f32 %v405, %v406
    %v408 = vrot.slane %v407, 1
    %v409 = vmax.f32 %v407, %v408
    %v410 = vrot.slane %v382, 4
    %v411 = vmax.f32 %v382, %v410
    %v412 = vrot.slane %v411, 2
    %v413 = vmax.f32 %v411, %v412
    %v414 = vrot.slane %v413, 1
    %v415 = vmax.f32 %v413, %v414
    %v416 = vrot.slane %v383, 4
    %v417 = vmax.f32 %v383, %v416
    %v418 = vrot.slane %v417, 2
    %v419 = vmax.f32 %v417, %v418
    %v420 = vrot.slane %v419, 1
    %v421 = vmax.f32 %v419, %v420
    %v422 = vrot.slane %v384, 4
    %v423 = vmax.f32 %v384, %v422
    %v424 = vrot.slane %v423, 2
    %v425 = vmax.f32 %v423, %v424
    %v426 = vrot.slane %v425, 1
    %v427 = vmax.f32 %v425, %v426
    %v428 = vrot.slane %v385, 4
    %v429 = vmax.f32 %v385, %v428
    %v430 = vrot.slane %v429, 2
    %v431 = vmax.f32 %v429, %v430
    %v432 = vrot.slane %v431, 1
    %v433 = vmax.f32 %v431, %v432
    %v434 = vld [vmem:[%s3] sm:$0x1]
    %v436 = vperm.slane %v434, 0
    %v438 = vadd.f32 %v391, %v436
    %v439 = vadd.f32 %v397, %v436
    %v440 = vadd.f32 %v403, %v436
    %v441 = vadd.f32 %v409, %v436
    %v442 = vadd.f32 %v415, %v436
    %v443 = vadd.f32 %v421, %v436
    %v444 = vadd.f32 %v427, %v436
    %v445 = vadd.f32 %v433, %v436
    %v446 = vmax.f32 %v438, 0.0
    %v447 = vmax.f32 %v439, 0.0
    %v448 = vmax.f32 %v440, 0.0
    %v449 = vmax.f32 %v441, 0.0
    %v450 = vmax.f32 %v442, 0.0
    %v451 = vmax.f32 %v443, 0.0
    %v452 = vmax.f32 %v444, 0.0
    %v453 = vmax.f32 %v445, 0.0
    %v454 = vld [vmem:[#allocation2] sm:$0xff]
    %v455 = vpack.c.bf16 %v454, %v454
    %v456 = vpack.c.bf16 %v446, %v446
    %v457 = vpack.c.bf16 %v447, %v447
    %v458 = vpack.c.bf16 %v448, %v448
    %v459 = vpack.c.bf16 %v449, %v449
    %v460 = vpack.c.bf16 %v450, %v450
    %v461 = vpack.c.bf16 %v451, %v451
    %v462 = vpack.c.bf16 %v452, %v452
    %v463 = vpack.c.bf16 %v453, %v453
    %v472 = vunpack.c.l.b16 %v456
    %v473 = vunpack.c.l.b16 %v457
    %v474 = vunpack.c.l.b16 %v458
    %v475 = vunpack.c.l.b16 %v459
    %v476 = vunpack.c.l.b16 %v460
    %v477 = vunpack.c.l.b16 %v461
    %v478 = vunpack.c.l.b16 %v462
    %v479 = vunpack.c.l.b16 %v463
    %v480 = vpack.c.b16 %v472, %v472
    %v481 = vpack.c.b16 %v473, %v473
    %v482 = vpack.c.b16 %v474, %v474
    %v483 = vpack.c.b16 %v475, %v475
    %v484 = vpack.c.b16 %v476, %v476
    %v485 = vpack.c.b16 %v477, %v477
    %v486 = vpack.c.b16 %v478, %v478
    %v487 = vpack.c.b16 %v479, %v479
    %v488 = vunpack.c.l.b16 %v480
    %v489 = vunpack.c.l.b16 %v481
    %v490 = vunpack.c.l.b16 %v482
    %v491 = vunpack.c.l.b16 %v483
    %v492 = vunpack.c.l.b16 %v484
    %v493 = vunpack.c.l.b16 %v485
    %v494 = vunpack.c.l.b16 %v486
    %v495 = vunpack.c.l.b16 %v487
    %v496 = vrot.slane %v489, 7
    %vm497 = vcmask 1041409
    %v498 = vsel %vm497, %v496, %v488
    %v499 = vrot.slane %v490, 6
    %vm500 = vcmask 1042434
    %v501 = vsel %vm500, %v499, %v498
    %v502 = vrot.slane %v491, 5
    %vm503 = vcmask 1043459
    %v504 = vsel %vm503, %v502, %v501
    %v505 = vrot.slane %v492, 4
    %vm506 = vcmask 1044484
    %v507 = vsel %vm506, %v505, %v504
    %v508 = vrot.slane %v493, 3
    %vm509 = vcmask 1045509
    %v510 = vsel %vm509, %v508, %v507
    %v511 = vrot.slane %v494, 2
    %vm512 = vcmask 1046534
    %v513 = vsel %vm512, %v511, %v510
    %v514 = vrot.slane %v495, 1
    %vm515 = vcmask 1047559
    %v516 = vsel %vm515, %v514, %v513
    %v517 = vpack.c.b16 %v516, %v516
    %v519 = vld [vmem:[#allocation8] sm:$0xf]
    %v520 = vld [vmem:[#allocation8 + $0x4] sm:$0xf]
    %v521 = vld [vmem:[#allocation8 + $0x8] sm:$0xf]
    %v522 = vld [vmem:[#allocation8 + $0xc] sm:$0xf]
    %v523 = vld [vmem:[#allocation8 + $0x10] sm:$0xf]
    %v524 = vld [vmem:[#allocation8 + $0x14] sm:$0xf]
    %v525 = vld [vmem:[#allocation8 + $0x18] sm:$0xf]
    %v526 = vld [vmem:[#allocation8 + $0x1c] sm:$0xf]
    %v527 = vld [vmem:[#allocation8 + $0x20] sm:$0xf]
    %v528 = vld [vmem:[#allocation8 + $0x24] sm:$0xf]
    %v529 = vld [vmem:[#allocation8 + $0x28] sm:$0xf]
    %v530 = vld [vmem:[#allocation8 + $0x2c] sm:$0xf]
    %v531 = vld [vmem:[#allocation8 + $0x30] sm:$0xf]
    %v532 = vld [vmem:[#allocation8 + $0x34] sm:$0xf]
    %v533 = vld [vmem:[#allocation8 + $0x38] sm:$0xf]
    %v534 = vld [vmem:[#allocation8 + $0x3c] sm:$0xf]
    %v535 = vld [vmem:[#allocation8 + $0x40] sm:$0xf]
    %v536 = vld [vmem:[#allocation8 + $0x44] sm:$0xf]
    %v537 = vld [vmem:[#allocation8 + $0x48] sm:$0xf]
    %v538 = vld [vmem:[#allocation8 + $0x4c] sm:$0xf]
    %v539 = vld [vmem:[#allocation8 + $0x50] sm:$0xf]
    %v540 = vld [vmem:[#allocation8 + $0x54] sm:$0xf]
    %v541 = vld [vmem:[#allocation8 + $0x58] sm:$0xf]
    %v542 = vld [vmem:[#allocation8 + $0x5c] sm:$0xf]
    %v543 = vld [vmem:[#allocation8 + $0x60] sm:$0xf]
    %v544 = vld [vmem:[#allocation8 + $0x64] sm:$0xf]
    %v545 = vld [vmem:[#allocation8 + $0x68] sm:$0xf]
    %v546 = vld [vmem:[#allocation8 + $0x6c] sm:$0xf]
    %v547 = vld [vmem:[#allocation8 + $0x70] sm:$0xf]
    %v548 = vld [vmem:[#allocation8 + $0x74] sm:$0xf]
    %v549 = vld [vmem:[#allocation8 + $0x78] sm:$0xf]
    %v550 = vld [vmem:[#allocation8 + $0x7c] sm:$0xf]
    %v583 = vunpack.c.l.b16 %v519
    %v584 = vunpack.c.l.b16 %v520
    %v585 = vunpack.c.l.b16 %v521
    %v586 = vunpack.c.l.b16 %v522
    %v587 = vunpack.c.l.b16 %v523
    %v588 = vunpack.c.l.b16 %v524
    %v589 = vunpack.c.l.b16 %v525
    %v590 = vunpack.c.l.b16 %v526
    %v591 = vunpack.c.l.b16 %v527
    %v592 = vunpack.c.l.b16 %v528
    %v593 = vunpack.c.l.b16 %v529
    %v594 = vunpack.c.l.b16 %v530
    %v595 = vunpack.c.l.b16 %v531
    %v596 = vunpack.c.l.b16 %v532
    %v597 = vunpack.c.l.b16 %v533
    %v598 = vunpack.c.l.b16 %v534
    %v599 = vunpack.c.l.b16 %v535
    %v600 = vunpack.c.l.b16 %v536
    %v601 = vunpack.c.l.b16 %v537
    %v602 = vunpack.c.l.b16 %v538
    %v603 = vunpack.c.l.b16 %v539
    %v604 = vunpack.c.l.b16 %v540
    %v605 = vunpack.c.l.b16 %v541
    %v606 = vunpack.c.l.b16 %v542
    %v607 = vunpack.c.l.b16 %v543
    %v608 = vunpack.c.l.b16 %v544
    %v609 = vunpack.c.l.b16 %v545
    %v610 = vunpack.c.l.b16 %v546
    %v611 = vunpack.c.l.b16 %v547
    %v612 = vunpack.c.l.b16 %v548
    %v613 = vunpack.c.l.b16 %v549
    %v614 = vunpack.c.l.b16 %v550
    %v615 = vpack.c.b16 %v584, %v583
    %v616 = vpack.c.b16 %v586, %v585
    %v617 = vpack.c.b16 %v588, %v587
    %v618 = vpack.c.b16 %v590, %v589
    %v619 = vpack.c.b16 %v592, %v591
    %v620 = vpack.c.b16 %v594, %v593
    %v621 = vpack.c.b16 %v596, %v595
    %v622 = vpack.c.b16 %v598, %v597
    %v623 = vpack.c.b16 %v600, %v599
    %v624 = vpack.c.b16 %v602, %v601
    %v625 = vpack.c.b16 %v604, %v603
    %v626 = vpack.c.b16 %v606, %v605
    %v627 = vpack.c.b16 %v608, %v607
    %v628 = vpack.c.b16 %v610, %v609
    %v629 = vpack.c.b16 %v612, %v611
    %v630 = vpack.c.b16 %v614, %v613
    %647 = vmatpush.bf16.msra.mxu0 %v622
    %648 = vmatpush.bf16.msra.mxu0 %v621
    %649 = vmatpush.bf16.msra.mxu0 %v620
    %650 = vmatpush.bf16.msra.mxu0 %v619
    %651 = vmatpush.bf16.msra.mxu0 %v618
    %652 = vmatpush.bf16.msra.mxu0 %v617
    %653 = vmatpush.bf16.msra.mxu0 %v616
    %654 = vmatpush.bf16.msra.mxu0 %v615
    %655 = vmatmul.bf16.gmra.mxu0 %v455
    %v656 = vpop.f32.mrf.mxu0
    %v657 = vadd.f32 0.0, %v656
    %v658 = vpop.f32.mrf.mxu0
    %659 = vdwg.mxu0
    %660 = vmatpush.bf16.msra.mxu0 %v630
    %661 = vmatpush.bf16.msra.mxu0 %v629
    %662 = vmatpush.bf16.msra.mxu0 %v628
    %663 = vmatpush.bf16.msra.mxu0 %v627
    %664 = vmatpush.bf16.msra.mxu0 %v626
    %665 = vmatpush.bf16.msra.mxu0 %v625
    %666 = vmatpush.bf16.msra.mxu0 %v624
    %667 = vmatpush.bf16.msra.mxu0 %v623
    %668 = vmatmul.bf16.gmra.mxu0 %v517
    %v669 = vpop.f32.mrf.mxu0
    %v670 = vadd.f32 %v657, %v669
    %v671 = vpop.f32.mrf.mxu0
    %672 = vdwg.mxu0
    %673 = vst [vmem:[#allocation10] sm:$0xff] %v670
    // Predicated region
    $region38: #{tpu_custom_call.1} parent=1 // pred_check
      _
    $region39: #{tpu_custom_call.1} parent=1 // pred_check_branch
      %675 = sbr.rel (0) target = $region41
    $region40: #{tpu_custom_call.1} parent=1 // pred_region
      %677 = vsyncadd [#allocation4], 0
      %s679 = sshll.u32 [#allocation10], 4
      %s680 = int_to_ptr.vmem [resolvable:$true] %s679
      %s681 = sshll.u32 %s5, 4
      %s682 = int_to_ptr.hbm [resolvable:$true] %s681
      %684 = dma.vmem_to_hbm [thread:$0]  %s680, 128, %s682, [#allocation4]
    $region41: #{tpu_custom_call.1} parent=1 // pred_fallthru
      _
    // Predicated region
    $region42: #{tpu_custom_call.1} parent=1 // pred_check
      _
    $region43: #{tpu_custom_call.1} parent=1 // pred_check_branch
      %686 = sbr.rel (0) target = $region45
    $region44: #{tpu_custom_call.1} parent=1 // pred_region
      %688 = dma.done [#allocation4], 128
    $region45: #{tpu_custom_call.1} parent=1 // pred_fallthru
      _
    %689 = vsyncpa [#allocation3], 1
    %690 = vsyncpa [#allocation6], 1
    %691 = vsyncpa [#allocation9], 1
    %692 = vsyncpa [#allocation4], 1

</llo_original>
